<compile_context>
chip_gen: v6e
topology: v6e:2x2x1
jax: 0.10.0
libtpu: 0.0.40
codegen_flags: <defaults>
</compile_context>

<pallas_src>
import math

import jax
import jax.numpy as jnp
from jax.experimental import pallas as pl
from jax.experimental.pallas import tpu as pltpu

_SUB = 8      # sublanes per f32 vreg
_LANE = 128   # lanes per vreg


def _round_up(a: int, b: int) -> int:
    return -(-a // b) * b


def _cdiv(a: int, b: int) -> int:
    return -(-a // b)


def _vmem_capacity_bytes(default: int = 128 * 1024 * 1024) -> int:
    try:
        return int(getattr(pltpu.get_tpu_info(), "vmem_capacity_bytes", default))
    except Exception:
        return default


# ----------------------------------------------------------------------------
# Loss-only kernel: loss = -dot(flatten(x)[0], W[:, neuron_id])
# ----------------------------------------------------------------------------
def _mei_loss_kernel(x_ref, w_ref, acc_ref):
    """One (core, k) step of the single-column dot product.

    x_ref, w_ref: (rk, 128) lane-major blocks of the flattened row-0 input and
                  the precomputed W column (rk is a multiple of the sublane tile).
    acc_ref:      (8, 128) f32 per-lane partial-sum slab for this core, resident
                  across the K axis (output block index depends only on the core).
    """
    k = pl.program_id(1)

    @pl.when(k == 0)
    def _():
        acc_ref[...] = jnp.zeros_like(acc_ref)

    prod = x_ref[...].astype(jnp.float32) * w_ref[...].astype(jnp.float32)  # VPU
    rk = prod.shape[0]
    # Fold the (rk, 128) product down to one (8, 128) vreg of per-lane partials:
    # pure VPU adds (no per-step cross-lane reduce); final reduction is a tiny
    # wrapper-side sum over 2*8*128 floats.
    acc_ref[...] += prod.reshape(rk // _SUB, _SUB, _LANE).sum(axis=0)


def _loss_tiling(F: int, *, sub_mult: int = _SUB, max_rows_per_step: int = 4096):
    """Tiling for the 2-core x K single-column loss kernel.

    Returns (rk, nk, f_pad): rows per grid step, K steps per core, padded length.
    """
    R = _cdiv(F, _LANE)                                   # rows of the (R, 128) layout
    rk = min(_round_up(_cdiv(R, 2), sub_mult),
             _round_up(max_rows_per_step, sub_mult))      # rows per step (per core)
    nk = _cdiv(_cdiv(R, 2), rk)                           # K steps per core
    f_pad = 2 * nk * rk * _LANE
    return rk, nk, f_pad


def mei_neuron_loss(x_nchw, w_col2d, rk: int, nk: int, *, x_dtype=jnp.float32):
    """loss = -dot(flatten(x)[0], w_col).

    w_col2d: the column W[:, neuron_id], already zero-padded to f_pad and
             reshaped lane-major to (f_pad // 128, 128) at weight-load time.
    """
    B = x_nchw.shape[0]
    F = math.prod(x_nchw.shape[1:])
    R_pad = w_col2d.shape[0]
    f_pad = R_pad * _LANE
    assert 2 * nk * rk == R_pad, (rk, nk, R_pad)

    # Only the x row is prepared per call (F elements -- negligible vs W).
    x0 = x_nchw.reshape(B, F)[0].astype(x_dtype)
    x0 = jnp.pad(x0, (0, f_pad - F)).reshape(R_pad, _LANE)

    partials = pl.pallas_call(
        _mei_loss_kernel,
        out_shape=jax.ShapeDtypeStruct((2 * _SUB, _LANE), jnp.float32),
        grid_spec=pltpu.PrefetchScalarGridSpec(
            num_scalar_prefetch=0,
            grid=(2, nk),   # (core-split half, K steps within the half)
            in_specs=[
                pl.BlockSpec((rk, _LANE), lambda c, k: (c * nk + k, 0)),
                pl.BlockSpec((rk, _LANE), lambda c, k: (c * nk + k, 0)),
            ],
            out_specs=pl.BlockSpec((_SUB, _LANE), lambda c, k: (c, 0)),
        ),
        compiler_params=pltpu.CompilerParams(
            dimension_semantics=("parallel", "arbitrary"),
            vmem_limit_bytes=32 << 20,
        ),
    )(x0, w_col2d)

    return -jnp.sum(partials)


# ----------------------------------------------------------------------------
# Full-response kernel: G = flatten(x) @ W   (kept for generality / testing)
# ----------------------------------------------------------------------------
def _mei_matmul_kernel(x_ref, w_ref, g_ref):
    """One (j, k) grid step of G = x @ W.

    x_ref: (B, tk) sliver of the flattened input
    w_ref: (tk, tn) tile of W
    g_ref: (B, tn) f32 output block; resident across the K axis -> accumulator
    """
    k = pl.program_id(1)

    @pl.when(k == 0)
    def _():
        g_ref[...] = jnp.zeros_like(g_ref)

    g_ref[...] += jnp.dot(x_ref[...], w_ref[...],
                          preferred_element_type=jnp.float32)


def mei_response(x_nchw, w, *, compute_dtype=jnp.float32, tn=None, tk=None):
    """G = flatten(x) @ W as a Pallas kernel. Returns (B, N) float32."""
    B = x_nchw.shape[0]
    F = math.prod(x_nchw.shape[1:])
    N = w.shape[1]
    assert w.shape[0] == F, (w.shape, F)

    x_flat = x_nchw.reshape(B, F).astype(compute_dtype)
    w = w.astype(compute_dtype)          # no-op if W was pre-cast at load time
    itemsize = jnp.dtype(compute_dtype).itemsize

    # N tile: lane-dense. Multiple of 256 fills the 256-wide MXU on v6e/v7x,
    # but don't pad tiny readouts past 128 (padding inflates the dominant
    # W HBM stream).
    if tn is None:
        tn = 128 if N <= 128 else min(_round_up(N, 256), 1024)
    n_pad = _round_up(N, tn)

    # Per-generation W-tile budget: ~14 MiB/buffer on 64 MiB-VMEM v7x,
    # ~20 MiB/buffer on 128 MiB-VMEM v5e/v6e; vmem cap lifted to match.
    vmem_cap = _vmem_capacity_bytes()
    if vmem_cap <= 64 * 1024 * 1024:
        w_buf_budget, vmem_cap_limit = 14 * 1024 * 1024, 56 * 1024 * 1024
    else:
        w_buf_budget, vmem_cap_limit = 20 * 1024 * 1024, 100 * 1024 * 1024

    if tk is None:
        tk = max(512, (w_buf_budget // (tn * itemsize)) // 128 * 128)
    tk = min(tk, _round_up(F, 128))
    f_pad = _round_up(F, tk)

    # Ragged-edge zero padding (contributes nothing to the matmul). No-op when
    # shapes are already aligned.
    # TODO(synk): for production-size W, pre-pad/pre-cast once at weight-load
    # time (as MEILoss does for its column) instead of per call.
    if f_pad != F:
        x_flat = jnp.pad(x_flat, ((0, 0), (0, f_pad - F)))
        w = jnp.pad(w, ((0, f_pad - F), (0, 0)))
    if n_pad != N:
        w = jnp.pad(w, ((0, 0), (0, n_pad - N)))

    grid = (n_pad // tn, f_pad // tk)

    vmem_need = (
        2 * tk * tn * itemsize        # W double buffer
        + 2 * B * tk * itemsize       # x slivers, double buffered (tiny at B=2)
        + 2 * B * tn * 4              # resident f32 output block
        + (2 << 20)                   # headroom
    )
    vmem_limit = int(min(max(vmem_need, 32 << 20), vmem_cap_limit))

    g = pl.pallas_call(
        _mei_matmul_kernel,
        out_shape=jax.ShapeDtypeStruct((B, n_pad), jnp.float32),
        grid_spec=pltpu.PrefetchScalarGridSpec(
            num_scalar_prefetch=0,
            grid=grid,
            in_specs=[
                pl.BlockSpec((B, tk), lambda j, k: (0, k)),
                pl.BlockSpec((tk, tn), lambda j, k: (k, j)),
            ],
            out_specs=pl.BlockSpec((B, tn), lambda j, k: (0, j)),
        ),
        compiler_params=pltpu.CompilerParams(
            dimension_semantics=("parallel", "arbitrary"),
            vmem_limit_bytes=vmem_limit,
        ),
    )(x_flat, w)

    return g[:, :N]


# ----------------------------------------------------------------------------
# Module wrapper
# ----------------------------------------------------------------------------
class MEILoss:
    """JAX/Pallas equivalent of the PyTorch MEI_Loss module.

    forward(x): stores self.loss = -(flatten(x)[0] @ W)[neuron_id]; returns x.
    """

    def __init__(self, target_response, weights, neuron_id=1,
                 weight_dtype=jnp.float32):
        # `weights` plays the role of load_fit_weights(...).T, i.e. shape (F, N).
        self.W = jnp.asarray(weights, dtype=jnp.float32)
        F, n_neurons = self.W.shape
        self.neuron_id = int(neuron_id)
        if not 0 <= self.neuron_id < n_neurons:
            raise ValueError(
                f"neuron_id {self.neuron_id} out of range [0, {n_neurons})")

        # init-time glue (detached target), plain JAX:
        self.target = jnp.matmul(
            jnp.asarray(target_response, dtype=jnp.float32), self.W)
        self.loss = None

        # --- one-time weight prep for the loss path (no per-call W work) ---
        # Only -G[0, neuron_id] is ever consumed, so precompute the single
        # column W[:, neuron_id], pad it to the kernel's 2-core x K tiling,
        # cast once, and store it lane-major as (rows, 128).
        sub_mult = max(_SUB, 32 // jnp.dtype(weight_dtype).itemsize)
        rk, nk, f_pad = _loss_tiling(F, sub_mult=sub_mult)
        self._rk, self._nk = rk, nk
        col = self.W[:, self.neuron_id]
        self._w_col2d = (
            jnp.pad(col, (0, f_pad - F))
            .astype(weight_dtype)
            .reshape(f_pad // _LANE, _LANE)
        )

    def __call__(self, x_nchw):
        self.loss = mei_neuron_loss(x_nchw, self._w_col2d, self._rk, self._nk)
        return x_nchw  # forward returns input unchanged


if __name__ == "__main__":
    key = jax.random.PRNGKey(0)
    k_x, k_w, k_t = jax.random.split(key, 3)

    # Small deterministic shapes consistent with the module's forward:
    B, C, H, W = 2, 4, 16, 16          # NCHW image-like input
    F = C * H * W                      # 1024 flattened features
    N_NEURONS = 128                    # synthetic readout width
    NEURON_ID = 1

    x = jax.random.normal(k_x, (B, C, H, W), dtype=jnp.float32)
    # Synthetic deterministic stand-in for load_fit_weights(...).T -> (F, N)
    w_fit = jax.random.normal(k_w, (F, N_NEURONS), dtype=jnp.float32) * 0.02
    target_response = jax.random.normal(k_t, (1, F), dtype=jnp.float32)

    # Plain-JAX reference of the PyTorch math.
    g_ref = jnp.matmul(x.reshape(B, -1), w_fit)
    loss_ref = -g_ref[0, NEURON_ID]

    # Full-response kernel path.
    g = mei_response(x, w_fit)
    jax.block_until_ready(g)
    assert g.shape == (B, N_NEURONS)
    assert jnp.allclose(g, g_ref, rtol=1e-3, atol=1e-3), float(
        jnp.max(jnp.abs(g - g_ref)))

    # Module path (loss-only, single-column W stream).
    mei = MEILoss(target_response, w_fit, neuron_id=NEURON_ID)
    out = mei(x)
    jax.block_until_ready(out)
    jax.block_until_ready(mei.loss)

    assert out.shape == x.shape and jnp.allclose(out, x)
    assert jnp.allclose(mei.loss, loss_ref, rtol=1e-3, atol=1e-3), (
        float(mei.loss), float(loss_ref))

    print("KERNEL_OK")
</pallas_src>

<mosaic_0001>
module attributes {stable_mosaic.version = 11 : i64} {
  func.func @_mei_matmul_kernel(%arg0: i32, %arg1: i32, %arg2: memref<2x1024xf32, #tpu.memory_space<vmem>>, %arg3: memref<1024x128xf32, #tpu.memory_space<vmem>>, %arg4: memref<2x128xf32, #tpu.memory_space<vmem>>) attributes {dimension_semantics = [#tpu.dimension_semantics<parallel>, #tpu.dimension_semantics<arbitrary>], iteration_bounds = array<i64: 1, 1>, scalar_prefetch = 0 : i64, scratch_operands = 0 : i64, tpu.core_type = #tpu.core_type<tc>, window_params = [{transform_indices = @transform_0, window_bounds = array<i64: 2, 1024>}, {transform_indices = @transform_1, window_bounds = array<i64: 1024, 128>}, {transform_indices = @transform_2, window_bounds = array<i64: 2, 128>}]} {
    %c0_i32 = arith.constant 0 : i32
    %0 = arith.cmpi eq, %arg1, %c0_i32 : i32
    %1 = arith.extui %0 : i1 to i32
    %c0_i32_0 = arith.constant 0 : i32
    %2 = arith.cmpi ne, %1, %c0_i32_0 : i32
    scf.if %2 {
      %cst_8 = arith.constant 0.000000e+00 : f32
      %9 = vector.broadcast %cst_8 : f32 to vector<2x128xf32>
      %c0_9 = arith.constant 0 : index
      %c0_10 = arith.constant 0 : index
      %10 = vector.load %arg4[%c0_9, %c0_10] : memref<2x128xf32, #tpu.memory_space<vmem>>, vector<2x128xf32>
      tpu.vector_store %arg4[%c0_9, %c0_10], %9 {strides = array<i32>} : memref<2x128xf32, #tpu.memory_space<vmem>>, vector<2x128xf32>,
    } else {
    }
    %c0 = arith.constant 0 : index
    %c0_1 = arith.constant 0 : index
    %3 = vector.load %arg4[%c0, %c0_1] : memref<2x128xf32, #tpu.memory_space<vmem>>, vector<2x128xf32>
    %c0_2 = arith.constant 0 : index
    %c0_3 = arith.constant 0 : index
    %4 = vector.load %arg2[%c0_2, %c0_3] : memref<2x1024xf32, #tpu.memory_space<vmem>>, vector<2x1024xf32>
    %c0_4 = arith.constant 0 : index
    %c0_5 = arith.constant 0 : index
    %5 = vector.load %arg3[%c0_4, %c0_5] : memref<1024x128xf32, #tpu.memory_space<vmem>>, vector<1024x128xf32>
    %cst = arith.constant dense<0.000000e+00> : vector<2x128xf32>
    %6 = tpu.matmul %4, %5, %cst {dimension_numbers = #tpu.dot_dimension_numbers<[1], [0], [0], [1], [0, 0, 1, 1], [], []>} : vector<2x1024xf32>, vector<1024x128xf32>, vector<2x128xf32> -> vector<2x128xf32>
    %7 = arith.addf %3, %6 : vector<2x128xf32>
    %c0_6 = arith.constant 0 : index
    %c0_7 = arith.constant 0 : index
    %8 = vector.load %arg4[%c0_6, %c0_7] : memref<2x128xf32, #tpu.memory_space<vmem>>, vector<2x128xf32>
    tpu.vector_store %arg4[%c0_6, %c0_7], %7 {strides = array<i32>} : memref<2x128xf32, #tpu.memory_space<vmem>>, vector<2x128xf32>,
    return
  }
  func.func @transform_0(%arg0: i32, %arg1: i32) -> (i32, i32) {
    %c0_i32 = arith.constant 0 : i32
    %c0_i32_0 = arith.constant 0 : i32
    return %c0_i32, %arg1 : i32, i32
  }
  func.func @transform_1(%arg0: i32, %arg1: i32) -> (i32, i32) {
    %c0_i32 = arith.constant 0 : i32
    return %arg1, %arg0 : i32, i32
  }
  func.func @transform_2(%arg0: i32, %arg1: i32) -> (i32, i32) {
    %c0_i32 = arith.constant 0 : i32
    %c0_i32_0 = arith.constant 0 : i32
    return %c0_i32, %arg0 : i32, i32
  }
}

</mosaic_0001>

<llo_original>
// kernel: tpu_custom_call.1
$region0: #{tpu_custom_call.1}
  #allocation0 [shape = 'u32[]', space=smem, size = 0x4, offset = 0x4, fixed_abs, tag = 'smem constant byte address 0x4 - core index']
  #allocation1 [shape = 'u32[144,128]{1,0:T(1,128)}', space=vmem, size = 0x12000, scoped, tag = 'internal scratch']
  %s0 = inlined_call_operand.hbm [shape: f32[2,1024], index: 0, kind: input, shape index: {}]
  %s1 = inlined_call_operand.hbm [shape: f32[1024,128], index: 1, kind: input, shape index: {}]
  %s2 = inlined_call_operand.hbm [shape: f32[2,128], index: 2, kind: output, shape index: {}]
  %s3 = sld [smem:[#allocation0]]
  $region30: #{tpu_custom_call.1} parent=0
    _
  %s5 = ssub.s32 1, %s3
  %s6 = scalar_select 0, %s5, %s3
  $region1: #{tpu_custom_call.1} parent=0
    #allocation2 [shape = 'u8[8192]{0}', space=vmem, size = 0x2000, scoped, tag = 'input window, operand 0, single buffered']
    #allocation3 [shape = 's32[1]{0}', space=sflag, size = 0x4, scoped, tag = 'scoped memory for tpu_custom_call.1']
    #allocation4 [shape = 's32[1]{0}', space=sflag, size = 0x4, scoped, tag = 'scoped memory for tpu_custom_call.1']
    #allocation5 [shape = 'u8[524288]{0}', space=vmem, size = 0x80000, scoped, tag = 'input window, operand 1, single buffered']
    #allocation6 [shape = 's32[1]{0}', space=sflag, size = 0x4, scoped, tag = 'scoped memory for tpu_custom_call.1']
    #allocation7 [shape = 'u8[1024]{0}', space=vmem, size = 0x400, scoped, tag = 'output window, operand 0, single buffered']
    %7 = vsyncpa [#allocation3], 0
    %8 = vsyncpa [#allocation6], 0
    %9 = vsyncpa [#allocation4], 0
    // Predicated region
    $region2: #{tpu_custom_call.1} parent=1 // pred_check
      _
    $region3: #{tpu_custom_call.1} parent=1 // pred_check_branch
      %11 = sbr.rel (0) target = $region5
    $region4: #{tpu_custom_call.1} parent=1 // pred_region
      %s13 = ssub.s32 256, 256
      %14 = vsyncadd [#allocation3], %s13
      %s16 = sshll.u32 [#allocation2], 4
      %s17 = int_to_ptr.vmem [resolvable:$true] %s16
      %19 = dma.hbm_to_vmem [thread:$0]  %s0, 256, %s17, [#allocation3]
    $region5: #{tpu_custom_call.1} parent=1 // pred_fallthru
      _
    // Predicated region
    $region6: #{tpu_custom_call.1} parent=1 // pred_check
      _
    $region7: #{tpu_custom_call.1} parent=1 // pred_check_branch
      %21 = sbr.rel (0) target = $region9
    $region8: #{tpu_custom_call.1} parent=1 // pred_region
      %s23 = ssub.s32 16384, 16384
      %24 = vsyncadd [#allocation6], %s23
      %s25 = sshll.u32 [#allocation5], 4
      %s26 = int_to_ptr.vmem [resolvable:$true] %s25
      %31 = dma.hbm_to_vmem [thread:$0]  %s1, 16384, %s26, [#allocation6], 128, 128, 8
    $region9: #{tpu_custom_call.1} parent=1 // pred_fallthru
      _
    // Predicated region
    $region10: #{tpu_custom_call.1} parent=1 // pred_check
      _
    $region11: #{tpu_custom_call.1} parent=1 // pred_check_branch
      %33 = sbr.rel (0) target = $region13
    $region12: #{tpu_custom_call.1} parent=1 // pred_region
      %34 = dma.done [#allocation3], 256
    $region13: #{tpu_custom_call.1} parent=1 // pred_fallthru
      _
    // Predicated region
    $region14: #{tpu_custom_call.1} parent=1 // pred_check
      _
    $region15: #{tpu_custom_call.1} parent=1 // pred_check_branch
      %36 = sbr.rel (0) target = $region17
    $region16: #{tpu_custom_call.1} parent=1 // pred_region
      %37 = dma.done [#allocation6], 16384
    $region17: #{tpu_custom_call.1} parent=1 // pred_fallthru
      _
    %p38 = scmp.eq.s32.totalorder 0, 0
    // Predicated region
    $region18: #{tpu_custom_call.1} parent=1 // pred_check
      %p39 = pneg %p38
    $region19: #{tpu_custom_call.1} parent=1 // pred_check_branch
      %41 = sbr.rel (%p39) target = $region21
    $region20: #{tpu_custom_call.1} parent=1 // pred_region
      %42 = vst [vmem:[#allocation7] sm:$0x3] 0.0
    $region21: #{tpu_custom_call.1} parent=1 // pred_fallthru
      _
    %v43 = vld [vmem:[#allocation7] sm:$0x3]
    %v44 = vld [vmem:[#allocation2] sm:$0xff]
    %v45 = vld [vmem:[#allocation2 + $0x8] sm:$0xff]
    %v46 = vld [vmem:[#allocation5] sm:$0xff]
    %v47 = vld [vmem:[#allocation5 + $0x8] sm:$0xff]
    %v48 = vld [vmem:[#allocation5 + $0x10] sm:$0xff]
    %v49 = vld [vmem:[#allocation5 + $0x18] sm:$0xff]
    %v50 = vld [vmem:[#allocation5 + $0x20] sm:$0xff]
    %v51 = vld [vmem:[#allocation5 + $0x28] sm:$0xff]
    %v52 = vld [vmem:[#allocation5 + $0x30] sm:$0xff]
    %v53 = vld [vmem:[#allocation5 + $0x38] sm:$0xff]
    %v54 = vld [vmem:[#allocation5 + $0x40] sm:$0xff]
    %v55 = vld [vmem:[#allocation5 + $0x48] sm:$0xff]
    %v56 = vld [vmem:[#allocation5 + $0x50] sm:$0xff]
    %v57 = vld [vmem:[#allocation5 + $0x58] sm:$0xff]
    %v58 = vld [vmem:[#allocation5 + $0x60] sm:$0xff]
    %v59 = vld [vmem:[#allocation5 + $0x68] sm:$0xff]
    %v60 = vld [vmem:[#allocation5 + $0x70] sm:$0xff]
    %v61 = vld [vmem:[#allocation5 + $0x78] sm:$0xff]
    %v62 = vld [vmem:[#allocation5 + $0x80] sm:$0xff]
    %v63 = vld [vmem:[#allocation5 + $0x88] sm:$0xff]
    %v64 = vld [vmem:[#allocation5 + $0x90] sm:$0xff]
    %v65 = vld [vmem:[#allocation5 + $0x98] sm:$0xff]
    %v66 = vld [vmem:[#allocation5 + $0xa0] sm:$0xff]
    %v67 = vld [vmem:[#allocation5 + $0xa8] sm:$0xff]
    %v68 = vld [vmem:[#allocation5 + $0xb0] sm:$0xff]
    %v69 = vld [vmem:[#allocation5 + $0xb8] sm:$0xff]
    %v70 = vld [vmem:[#allocation5 + $0xc0] sm:$0xff]
    %v71 = vld [vmem:[#allocation5 + $0xc8] sm:$0xff]
    %v72 = vld [vmem:[#allocation5 + $0xd0] sm:$0xff]
    %v73 = vld [vmem:[#allocation5 + $0xd8] sm:$0xff]
    %v74 = vld [vmem:[#allocation5 + $0xe0] sm:$0xff]
    %v75 = vld [vmem:[#allocation5 + $0xe8] sm:$0xff]
    %v76 = vld [vmem:[#allocation5 + $0xf0] sm:$0xff]
    %v77 = vld [vmem:[#allocation5 + $0xf8] sm:$0xff]
    %v78 = vld [vmem:[#allocation5 + $0x100] sm:$0xff]
    %v79 = vld [vmem:[#allocation5 + $0x108] sm:$0xff]
    %v80 = vld [vmem:[#allocation5 + $0x110] sm:$0xff]
    %v81 = vld [vmem:[#allocation5 + $0x118] sm:$0xff]
    %v82 = vld [vmem:[#allocation5 + $0x120] sm:$0xff]
    %v83 = vld [vmem:[#allocation5 + $0x128] sm:$0xff]
    %v84 = vld [vmem:[#allocation5 + $0x130] sm:$0xff]
    %v85 = vld [vmem:[#allocation5 + $0x138] sm:$0xff]
    %v86 = vld [vmem:[#allocation5 + $0x140] sm:$0xff]
    %v87 = vld [vmem:[#allocation5 + $0x148] sm:$0xff]
    %v88 = vld [vmem:[#allocation5 + $0x150] sm:$0xff]
    %v89 = vld [vmem:[#allocation5 + $0x158] sm:$0xff]
    %v90 = vld [vmem:[#allocation5 + $0x160] sm:$0xff]
    %v91 = vld [vmem:[#allocation5 + $0x168] sm:$0xff]
    %v92 = vld [vmem:[#allocation5 + $0x170] sm:$0xff]
    %v93 = vld [vmem:[#allocation5 + $0x178] sm:$0xff]
    %v94 = vld [vmem:[#allocation5 + $0x180] sm:$0xff]
    %v95 = vld [vmem:[#allocation5 + $0x188] sm:$0xff]
    %v96 = vld [vmem:[#allocation5 + $0x190] sm:$0xff]
    %v97 = vld [vmem:[#allocation5 + $0x198] sm:$0xff]
    %v98 = vld [vmem:[#allocation5 + $0x1a0] sm:$0xff]
    %v99 = vld [vmem:[#allocation5 + $0x1a8] sm:$0xff]
    %v100 = vld [vmem:[#allocation5 + $0x1b0] sm:$0xff]
    %v101 = vld [vmem:[#allocation5 + $0x1b8] sm:$0xff]
    %v102 = vld [vmem:[#allocation5 + $0x1c0] sm:$0xff]
    %v103 = vld [vmem:[#allocation5 + $0x1c8] sm:$0xff]
    %v104 = vld [vmem:[#allocation5 + $0x1d0] sm:$0xff]
    %v105 = vld [vmem:[#allocation5 + $0x1d8] sm:$0xff]
    %v106 = vld [vmem:[#allocation5 + $0x1e0] sm:$0xff]
    %v107 = vld [vmem:[#allocation5 + $0x1e8] sm:$0xff]
    %v108 = vld [vmem:[#allocation5 + $0x1f0] sm:$0xff]
    %v109 = vld [vmem:[#allocation5 + $0x1f8] sm:$0xff]
    %v110 = vld [vmem:[#allocation5 + $0x200] sm:$0xff]
    %v111 = vld [vmem:[#allocation5 + $0x208] sm:$0xff]
    %v112 = vld [vmem:[#allocation5 + $0x210] sm:$0xff]
    %v113 = vld [vmem:[#allocation5 + $0x218] sm:$0xff]
    %v114 = vld [vmem:[#allocation5 + $0x220] sm:$0xff]
    %v115 = vld [vmem:[#allocation5 + $0x228] sm:$0xff]
    %v116 = vld [vmem:[#allocation5 + $0x230] sm:$0xff]
    %v117 = vld [vmem:[#allocation5 + $0x238] sm:$0xff]
    %v118 = vld [vmem:[#allocation5 + $0x240] sm:$0xff]
    %v119 = vld [vmem:[#allocation5 + $0x248] sm:$0xff]
    %v120 = vld [vmem:[#allocation5 + $0x250] sm:$0xff]
    %v121 = vld [vmem:[#allocation5 + $0x258] sm:$0xff]
    %v122 = vld [vmem:[#allocation5 + $0x260] sm:$0xff]
    %v123 = vld [vmem:[#allocation5 + $0x268] sm:$0xff]
    %v124 = vld [vmem:[#allocation5 + $0x270] sm:$0xff]
    %v125 = vld [vmem:[#allocation5 + $0x278] sm:$0xff]
    %v126 = vld [vmem:[#allocation5 + $0x280] sm:$0xff]
    %v127 = vld [vmem:[#allocation5 + $0x288] sm:$0xff]
    %v128 = vld [vmem:[#allocation5 + $0x290] sm:$0xff]
    %v129 = vld [vmem:[#allocation5 + $0x298] sm:$0xff]
    %v130 = vld [vmem:[#allocation5 + $0x2a0] sm:$0xff]
    %v131 = vld [vmem:[#allocation5 + $0x2a8] sm:$0xff]
    %v132 = vld [vmem:[#allocation5 + $0x2b0] sm:$0xff]
    %v133 = vld [vmem:[#allocation5 + $0x2b8] sm:$0xff]
    %v134 = vld [vmem:[#allocation5 + $0x2c0] sm:$0xff]
    %v135 = vld [vmem:[#allocation5 + $0x2c8] sm:$0xff]
    %v136 = vld [vmem:[#allocation5 + $0x2d0] sm:$0xff]
    %v137 = vld [vmem:[#allocation5 + $0x2d8] sm:$0xff]
    %v138 = vld [vmem:[#allocation5 + $0x2e0] sm:$0xff]
    %v139 = vld [vmem:[#allocation5 + $0x2e8] sm:$0xff]
    %v140 = vld [vmem:[#allocation5 + $0x2f0] sm:$0xff]
    %v141 = vld [vmem:[#allocation5 + $0x2f8] sm:$0xff]
    %v142 = vld [vmem:[#allocation5 + $0x300] sm:$0xff]
    %v143 = vld [vmem:[#allocation5 + $0x308] sm:$0xff]
    %v144 = vld [vmem:[#allocation5 + $0x310] sm:$0xff]
    %v145 = vld [vmem:[#allocation5 + $0x318] sm:$0xff]
    %v146 = vld [vmem:[#allocation5 + $0x320] sm:$0xff]
    %v147 = vld [vmem:[#allocation5 + $0x328] sm:$0xff]
    %v148 = vld [vmem:[#allocation5 + $0x330] sm:$0xff]
    %v149 = vld [vmem:[#allocation5 + $0x338] sm:$0xff]
    %v150 = vld [vmem:[#allocation5 + $0x340] sm:$0xff]
    %v151 = vld [vmem:[#allocation5 + $0x348] sm:$0xff]
    %v152 = vld [vmem:[#allocation5 + $0x350] sm:$0xff]
    %v153 = vld [vmem:[#allocation5 + $0x358] sm:$0xff]
    %v154 = vld [vmem:[#allocation5 + $0x360] sm:$0xff]
    %v155 = vld [vmem:[#allocation5 + $0x368] sm:$0xff]
    %v156 = vld [vmem:[#allocation5 + $0x370] sm:$0xff]
    %v157 = vld [vmem:[#allocation5 + $0x378] sm:$0xff]
    %v158 = vld [vmem:[#allocation5 + $0x380] sm:$0xff]
    %v159 = vld [vmem:[#allocation5 + $0x388] sm:$0xff]
    %v160 = vld [vmem:[#allocation5 + $0x390] sm:$0xff]
    %v161 = vld [vmem:[#allocation5 + $0x398] sm:$0xff]
    %v162 = vld [vmem:[#allocation5 + $0x3a0] sm:$0xff]
    %v163 = vld [vmem:[#allocation5 + $0x3a8] sm:$0xff]
    %v164 = vld [vmem:[#allocation5 + $0x3b0] sm:$0xff]
    %v165 = vld [vmem:[#allocation5 + $0x3b8] sm:$0xff]
    %v166 = vld [vmem:[#allocation5 + $0x3c0] sm:$0xff]
    %v167 = vld [vmem:[#allocation5 + $0x3c8] sm:$0xff]
    %v168 = vld [vmem:[#allocation5 + $0x3d0] sm:$0xff]
    %v169 = vld [vmem:[#allocation5 + $0x3d8] sm:$0xff]
    %v170 = vld [vmem:[#allocation5 + $0x3e0] sm:$0xff]
    %v171 = vld [vmem:[#allocation5 + $0x3e8] sm:$0xff]
    %v172 = vld [vmem:[#allocation5 + $0x3f0] sm:$0xff]
    %v173 = vld [vmem:[#allocation5 + $0x3f8] sm:$0xff]
    %v176 = vcombine.high %v44, %v44
    %v178 = vunpack.c.l.s4 1983009808
    %v179 = vunpack.c.0.s8 %v178
    %v180 = vlaneseq
    %v181 = vshrl.u32 %v180, 7
    %v182 = vsub.s32 %v179, %v181
    %v183 = vrot.slane %v44, %v182
    %v185 = vunpack.c.l.s4 1983009808
    %v186 = vunpack.c.0.s8 %v185
    %v187 = vlaneseq
    %v188 = vshrl.u32 %v187, 7
    %v189 = vsub.s32 %v186, %v188
    %v190 = vrot.slane %v176, %v189
    %v191 = vcombine.high %v183, %v183
    %v192 = vcombine.high %v190, %v190
    %v193 = vcombine.high %v45, %v45
    %v195 = vunpack.c.l.s4 1983009808
    %v196 = vunpack.c.0.s8 %v195
    %v197 = vlaneseq
    %v198 = vshrl.u32 %v197, 7
    %v199 = vsub.s32 %v196, %v198
    %v200 = vrot.slane %v45, %v199
    %v202 = vunpack.c.l.s4 1983009808
    %v203 = vunpack.c.0.s8 %v202
    %v204 = vlaneseq
    %v205 = vshrl.u32 %v204, 7
    %v206 = vsub.s32 %v203, %v205
    %v207 = vrot.slane %v193, %v206
    %v208 = vcombine.high %v200, %v200
    %v209 = vcombine.high %v207, %v207
    %218 = vmatprep.subr.mxu0 0.0
    %219 = vmatpush1.msra.mxu0 %v61
    %220 = vmatprep.subr.mxu0 0.0
    %221 = vmatpush1.msra.mxu0 %v60
    %222 = vmatprep.subr.mxu0 0.0
    %223 = vmatpush1.msra.mxu0 %v59
    %224 = vmatprep.subr.mxu0 0.0
    %225 = vmatpush1.msra.mxu0 %v58
    %226 = vmatprep.subr.mxu0 0.0
    %227 = vmatpush1.msra.mxu0 %v57
    %228 = vmatprep.subr.mxu0 0.0
    %229 = vmatpush1.msra.mxu0 %v56
    %230 = vmatprep.subr.mxu0 0.0
    %231 = vmatpush1.msra.mxu0 %v55
    %232 = vmatprep.subr.mxu0 0.0
    %233 = vmatpush1.msra.mxu0 %v54
    %234 = vmatprep.subr.mxu0 0.0
    %235 = vmatpush1.msra.mxu0 %v53
    %236 = vmatprep.subr.mxu0 0.0
    %237 = vmatpush1.msra.mxu0 %v52
    %238 = vmatprep.subr.mxu0 0.0
    %239 = vmatpush1.msra.mxu0 %v51
    %240 = vmatprep.subr.mxu0 0.0
    %241 = vmatpush1.msra.mxu0 %v50
    %242 = vmatprep.subr.mxu0 0.0
    %243 = vmatpush1.msra.mxu0 %v49
    %244 = vmatprep.subr.mxu0 0.0
    %245 = vmatpush1.msra.mxu0 %v48
    %246 = vmatprep.subr.mxu0 0.0
    %247 = vmatpush1.msra.mxu0 %v47
    %248 = vmatprep.subr.mxu0 0.0
    %249 = vmatpush1.msra.mxu0 %v46
    %250 = vmatprep.subr.mxu0 0.0
    %251 = vmatpush2.msra.mxu0 %v77
    %252 = vmatprep.subr.mxu0 0.0
    %253 = vmatpush2.msra.mxu0 %v76
    %254 = vmatprep.subr.mxu0 0.0
    %255 = vmatpush2.msra.mxu0 %v75
    %256 = vmatprep.subr.mxu0 0.0
    %257 = vmatpush2.msra.mxu0 %v74
    %258 = vmatprep.subr.mxu0 0.0
    %259 = vmatpush2.msra.mxu0 %v73
    %260 = vmatprep.subr.mxu0 0.0
    %261 = vmatpush2.msra.mxu0 %v72
    %262 = vmatprep.subr.mxu0 0.0
    %263 = vmatpush2.msra.mxu0 %v71
    %264 = vmatprep.subr.mxu0 0.0
    %265 = vmatpush2.msra.mxu0 %v70
    %266 = vmatprep.subr.mxu0 0.0
    %267 = vmatpush2.msra.mxu0 %v69
    %268 = vmatprep.subr.mxu0 0.0
    %269 = vmatpush2.msra.mxu0 %v68
    %270 = vmatprep.subr.mxu0 0.0
    %271 = vmatpush2.msra.mxu0 %v67
    %272 = vmatprep.subr.mxu0 0.0
    %273 = vmatpush2.msra.mxu0 %v66
    %274 = vmatprep.subr.mxu0 0.0
    %275 = vmatpush2.msra.mxu0 %v65
    %276 = vmatprep.subr.mxu0 0.0
    %277 = vmatpush2.msra.mxu0 %v64
    %278 = vmatprep.subr.mxu0 0.0
    %279 = vmatpush2.msra.mxu0 %v63
    %280 = vmatprep.subr.mxu0 0.0
    %281 = vmatpush2.msra.mxu0 %v62
    %282 = vmatprep.mubr.f32.mxu0 %v191
    %283 = vmatmul.mubr.f32.gmra.mxu0 %v183
    %v284 = vpop.f32.mrf.mxu0
    %v285 = vadd.f32 0.0, %v284
    %v286 = vpop.f32.mrf.mxu0
    %287 = vdwg.mxu0
    %288 = vmatprep.subr.mxu0 0.0
    %289 = vmatpush1.msra.mxu0 %v93
    %290 = vmatprep.subr.mxu0 0.0
    %291 = vmatpush1.msra.mxu0 %v92
    %292 = vmatprep.subr.mxu0 0.0
    %293 = vmatpush1.msra.mxu0 %v91
    %294 = vmatprep.subr.mxu0 0.0
    %295 = vmatpush1.msra.mxu0 %v90
    %296 = vmatprep.subr.mxu0 0.0
    %297 = vmatpush1.msra.mxu0 %v89
    %298 = vmatprep.subr.mxu0 0.0
    %299 = vmatpush1.msra.mxu0 %v88
    %300 = vmatprep.subr.mxu0 0.0
    %301 = vmatpush1.msra.mxu0 %v87
    %302 = vmatprep.subr.mxu0 0.0
    %303 = vmatpush1.msra.mxu0 %v86
    %304 = vmatprep.subr.mxu0 0.0
    %305 = vmatpush1.msra.mxu0 %v85
    %306 = vmatprep.subr.mxu0 0.0
    %307 = vmatpush1.msra.mxu0 %v84
    %308 = vmatprep.subr.mxu0 0.0
    %309 = vmatpush1.msra.mxu0 %v83
    %310 = vmatprep.subr.mxu0 0.0
    %311 = vmatpush1.msra.mxu0 %v82
    %312 = vmatprep.subr.mxu0 0.0
    %313 = vmatpush1.msra.mxu0 %v81
    %314 = vmatprep.subr.mxu0 0.0
    %315 = vmatpush1.msra.mxu0 %v80
    %316 = vmatprep.subr.mxu0 0.0
    %317 = vmatpush1.msra.mxu0 %v79
    %318 = vmatprep.subr.mxu0 0.0
    %319 = vmatpush1.msra.mxu0 %v78
    %320 = vmatprep.subr.mxu0 0.0
    %321 = vmatpush2.msra.mxu0 %v109
    %322 = vmatprep.subr.mxu0 0.0
    %323 = vmatpush2.msra.mxu0 %v108
    %324 = vmatprep.subr.mxu0 0.0
    %325 = vmatpush2.msra.mxu0 %v107
    %326 = vmatprep.subr.mxu0 0.0
    %327 = vmatpush2.msra.mxu0 %v106
    %328 = vmatprep.subr.mxu0 0.0
    %329 = vmatpush2.msra.mxu0 %v105
    %330 = vmatprep.subr.mxu0 0.0
    %331 = vmatpush2.msra.mxu0 %v104
    %332 = vmatprep.subr.mxu0 0.0
    %333 = vmatpush2.msra.mxu0 %v103
    %334 = vmatprep.subr.mxu0 0.0
    %335 = vmatpush2.msra.mxu0 %v102
    %336 = vmatprep.subr.mxu0 0.0
    %337 = vmatpush2.msra.mxu0 %v101
    %338 = vmatprep.subr.mxu0 0.0
    %339 = vmatpush2.msra.mxu0 %v100
    %340 = vmatprep.subr.mxu0 0.0
    %341 = vmatpush2.msra.mxu0 %v99
    %342 = vmatprep.subr.mxu0 0.0
    %343 = vmatpush2.msra.mxu0 %v98
    %344 = vmatprep.subr.mxu0 0.0
    %345 = vmatpush2.msra.mxu0 %v97
    %346 = vmatprep.subr.mxu0 0.0
    %347 = vmatpush2.msra.mxu0 %v96
    %348 = vmatprep.subr.mxu0 0.0
    %349 = vmatpush2.msra.mxu0 %v95
    %350 = vmatprep.subr.mxu0 0.0
    %351 = vmatpush2.msra.mxu0 %v94
    %352 = vmatprep.mubr.f32.mxu0 %v192
    %353 = vmatmul.mubr.f32.gmra.mxu0 %v190
    %v354 = vpop.f32.mrf.mxu0
    %v355 = vadd.f32 %v285, %v354
    %v356 = vpop.f32.mrf.mxu0
    %357 = vdwg.mxu0
    %358 = vmatprep.subr.mxu0 0.0
    %359 = vmatpush1.msra.mxu0 %v125
    %360 = vmatprep.subr.mxu0 0.0
    %361 = vmatpush1.msra.mxu0 %v124
    %362 = vmatprep.subr.mxu0 0.0
    %363 = vmatpush1.msra.mxu0 %v123
    %364 = vmatprep.subr.mxu0 0.0
    %365 = vmatpush1.msra.mxu0 %v122
    %366 = vmatprep.subr.mxu0 0.0
    %367 = vmatpush1.msra.mxu0 %v121
    %368 = vmatprep.subr.mxu0 0.0
    %369 = vmatpush1.msra.mxu0 %v120
    %370 = vmatprep.subr.mxu0 0.0
    %371 = vmatpush1.msra.mxu0 %v119
    %372 = vmatprep.subr.mxu0 0.0
    %373 = vmatpush1.msra.mxu0 %v118
    %374 = vmatprep.subr.mxu0 0.0
    %375 = vmatpush1.msra.mxu0 %v117
    %376 = vmatprep.subr.mxu0 0.0
    %377 = vmatpush1.msra.mxu0 %v116
    %378 = vmatprep.subr.mxu0 0.0
    %379 = vmatpush1.msra.mxu0 %v115
    %380 = vmatprep.subr.mxu0 0.0
    %381 = vmatpush1.msra.mxu0 %v114
    %382 = vmatprep.subr.mxu0 0.0
    %383 = vmatpush1.msra.mxu0 %v113
    %384 = vmatprep.subr.mxu0 0.0
    %385 = vmatpush1.msra.mxu0 %v112
    %386 = vmatprep.subr.mxu0 0.0
    %387 = vmatpush1.msra.mxu0 %v111
    %388 = vmatprep.subr.mxu0 0.0
    %389 = vmatpush1.msra.mxu0 %v110
    %390 = vmatprep.subr.mxu0 0.0
    %391 = vmatpush2.msra.mxu0 %v141
    %392 = vmatprep.subr.mxu0 0.0
    %393 = vmatpush2.msra.mxu0 %v140
    %394 = vmatprep.subr.mxu0 0.0
    %395 = vmatpush2.msra.mxu0 %v139
    %396 = vmatprep.subr.mxu0 0.0
    %397 = vmatpush2.msra.mxu0 %v138
    %398 = vmatprep.subr.mxu0 0.0
    %399 = vmatpush2.msra.mxu0 %v137
    %400 = vmatprep.subr.mxu0 0.0
    %401 = vmatpush2.msra.mxu0 %v136
    %402 = vmatprep.subr.mxu0 0.0
    %403 = vmatpush2.msra.mxu0 %v135
    %404 = vmatprep.subr.mxu0 0.0
    %405 = vmatpush2.msra.mxu0 %v134
    %406 = vmatprep.subr.mxu0 0.0
    %407 = vmatpush2.msra.mxu0 %v133
    %408 = vmatprep.subr.mxu0 0.0
    %409 = vmatpush2.msra.mxu0 %v132
    %410 = vmatprep.subr.mxu0 0.0
    %411 = vmatpush2.msra.mxu0 %v131
    %412 = vmatprep.subr.mxu0 0.0
    %413 = vmatpush2.msra.mxu0 %v130
    %414 = vmatprep.subr.mxu0 0.0
    %415 = vmatpush2.msra.mxu0 %v129
    %416 = vmatprep.subr.mxu0 0.0
    %417 = vmatpush2.msra.mxu0 %v128
    %418 = vmatprep.subr.mxu0 0.0
    %419 = vmatpush2.msra.mxu0 %v127
    %420 = vmatprep.subr.mxu0 0.0
    %421 = vmatpush2.msra.mxu0 %v126
    %422 = vmatprep.mubr.f32.mxu0 %v208
    %423 = vmatmul.mubr.f32.gmra.mxu0 %v200
    %v424 = vpop.f32.mrf.mxu0
    %v425 = vadd.f32 %v355, %v424
    %v426 = vpop.f32.mrf.mxu0
    %427 = vdwg.mxu0
    %428 = vmatprep.subr.mxu0 0.0
    %429 = vmatpush1.msra.mxu0 %v157
    %430 = vmatprep.subr.mxu0 0.0
    %431 = vmatpush1.msra.mxu0 %v156
    %432 = vmatprep.subr.mxu0 0.0
    %433 = vmatpush1.msra.mxu0 %v155
    %434 = vmatprep.subr.mxu0 0.0
    %435 = vmatpush1.msra.mxu0 %v154
    %436 = vmatprep.subr.mxu0 0.0
    %437 = vmatpush1.msra.mxu0 %v153
    %438 = vmatprep.subr.mxu0 0.0
    %439 = vmatpush1.msra.mxu0 %v152
    %440 = vmatprep.subr.mxu0 0.0
    %441 = vmatpush1.msra.mxu0 %v151
    %442 = vmatprep.subr.mxu0 0.0
    %443 = vmatpush1.msra.mxu0 %v150
    %444 = vmatprep.subr.mxu0 0.0
    %445 = vmatpush1.msra.mxu0 %v149
    %446 = vmatprep.subr.mxu0 0.0
    %447 = vmatpush1.msra.mxu0 %v148
    %448 = vmatprep.subr.mxu0 0.0
    %449 = vmatpush1.msra.mxu0 %v147
    %450 = vmatprep.subr.mxu0 0.0
    %451 = vmatpush1.msra.mxu0 %v146
    %452 = vmatprep.subr.mxu0 0.0
    %453 = vmatpush1.msra.mxu0 %v145
    %454 = vmatprep.subr.mxu0 0.0
    %455 = vmatpush1.msra.mxu0 %v144
    %456 = vmatprep.subr.mxu0 0.0
    %457 = vmatpush1.msra.mxu0 %v143
    %458 = vmatprep.subr.mxu0 0.0
    %459 = vmatpush1.msra.mxu0 %v142
    %460 = vmatprep.subr.mxu0 0.0
    %461 = vmatpush2.msra.mxu0 %v173
    %462 = vmatprep.subr.mxu0 0.0
    %463 = vmatpush2.msra.mxu0 %v172
    %464 = vmatprep.subr.mxu0 0.0
    %465 = vmatpush2.msra.mxu0 %v171
    %466 = vmatprep.subr.mxu0 0.0
    %467 = vmatpush2.msra.mxu0 %v170
    %468 = vmatprep.subr.mxu0 0.0
    %469 = vmatpush2.msra.mxu0 %v169
    %470 = vmatprep.subr.mxu0 0.0
    %471 = vmatpush2.msra.mxu0 %v168
    %472 = vmatprep.subr.mxu0 0.0
    %473 = vmatpush2.msra.mxu0 %v167
    %474 = vmatprep.subr.mxu0 0.0
    %475 = vmatpush2.msra.mxu0 %v166
    %476 = vmatprep.subr.mxu0 0.0
    %477 = vmatpush2.msra.mxu0 %v165
    %478 = vmatprep.subr.mxu0 0.0
    %479 = vmatpush2.msra.mxu0 %v164
    %480 = vmatprep.subr.mxu0 0.0
    %481 = vmatpush2.msra.mxu0 %v163
    %482 = vmatprep.subr.mxu0 0.0
    %483 = vmatpush2.msra.mxu0 %v162
    %484 = vmatprep.subr.mxu0 0.0
    %485 = vmatpush2.msra.mxu0 %v161
    %486 = vmatprep.subr.mxu0 0.0
    %487 = vmatpush2.msra.mxu0 %v160
    %488 = vmatprep.subr.mxu0 0.0
    %489 = vmatpush2.msra.mxu0 %v159
    %490 = vmatprep.subr.mxu0 0.0
    %491 = vmatpush2.msra.mxu0 %v158
    %492 = vmatprep.mubr.f32.mxu0 %v209
    %493 = vmatmul.mubr.f32.gmra.mxu0 %v207
    %v494 = vpop.f32.mrf.mxu0
    %v495 = vadd.f32 %v425, %v494
    %v496 = vpop.f32.mrf.mxu0
    %497 = vdwg.mxu0
    %v498 = vadd.f32 %v43, %v495
    %499 = vst [vmem:[#allocation7] sm:$0x3] %v498
    // Predicated region
    $region22: #{tpu_custom_call.1} parent=1 // pred_check
      _
    $region23: #{tpu_custom_call.1} parent=1 // pred_check_branch
      %501 = sbr.rel (0) target = $region25
    $region24: #{tpu_custom_call.1} parent=1 // pred_region
      %s503 = ssub.s32 32, 32
      %504 = vsyncadd [#allocation4], %s503
      %s506 = sshll.u32 [#allocation7], 4
      %s507 = int_to_ptr.vmem [resolvable:$true] %s506
      %509 = dma.vmem_to_hbm [thread:$0]  %s507, 32, %s2, [#allocation4]
    $region25: #{tpu_custom_call.1} parent=1 // pred_fallthru
      _
    // Predicated region
    $region26: #{tpu_custom_call.1} parent=1 // pred_check
      _
    $region27: #{tpu_custom_call.1} parent=1 // pred_check_branch
      %511 = sbr.rel (0) target = $region29
    $region28: #{tpu_custom_call.1} parent=1 // pred_region
      %512 = dma.done [#allocation4], 32
    $region29: #{tpu_custom_call.1} parent=1 // pred_fallthru
      _
    %513 = vsyncpa [#allocation3], 1
    %514 = vsyncpa [#allocation6], 1
    %515 = vsyncpa [#allocation4], 1

</llo_original>
